<compile_context>
chip_gen: v5e
topology: v5e:2x2
jax: 0.10.0
libtpu: 0.0.40
codegen_flags: <defaults>
</compile_context>

<pallas_src>
import functools

import jax
import jax.numpy as jnp
from jax.experimental import pallas as pl
from jax.experimental.pallas import tpu as pltpu


def _label_smoothing_kernel(x_ref, t_ref, part_ref, *, smoothing: float,
                            n_rows: int, tile_n: int):
    """One (tile_n, C) row-block: fused log-softmax + label-smoothed loss.

    Writes this block's summed (unnormalized) loss broadcast over a lane-dense
    (1, 8, 128) output tile; the wrapper sums the partials and divides by N.
    """
    i = pl.program_id(0)

    x = x_ref[...].astype(jnp.float32)          # (tile_n, C)
    t = t_ref[...].astype(jnp.float32)          # (tile_n, C)
    c = x.shape[-1]

    # Numerically-stable logsumexp pieces; log_probs itself is never formed.
    m = jnp.max(x, axis=-1, keepdims=True)                              # (tile_n, 1)
    shifted = x - m                                                     # (tile_n, C)
    lse = jnp.log(jnp.sum(jnp.exp(shifted), axis=-1, keepdims=True))    # (tile_n, 1)

    # nll    = -sum((shifted - lse) * t, -1) = lse * sum(t) - sum(shifted * t)
    # smooth = -mean(shifted - lse, -1)      = lse - sum(shifted) / C
    t_sum = jnp.sum(t, axis=-1, keepdims=True)
    st_sum = jnp.sum(shifted * t, axis=-1, keepdims=True)
    s_sum = jnp.sum(shifted, axis=-1, keepdims=True)

    nll = lse * t_sum - st_sum
    smooth = lse - s_sum * (1.0 / c)
    loss = (1.0 - smoothing) * nll + smoothing * smooth                 # (tile_n, 1)

    # Mask rows past the true end (only matters when tile_n does not divide N).
    row_ids = i * tile_n + jax.lax.broadcasted_iota(jnp.int32, (tile_n, 1), 0)
    loss = jnp.where(row_ids < n_rows, loss, 0.0)

    block_sum = jnp.sum(loss)
    part_ref[...] = jnp.broadcast_to(block_sum, part_ref.shape).astype(jnp.float32)


def _choose_tile_n(n: int, c: int, itemsize: int) -> int:
    # 2 inputs x 2 pipeline buffers per input must stay well under scoped VMEM
    # (32 MiB default; 64 MiB physical on v7x). Target ~16 MiB of input tiles.
    budget = 16 * 1024 * 1024
    per_row = 2 * 2 * c * itemsize
    tile = budget // max(per_row, 1)
    tile = max(8, min(512, (tile // 8) * 8))
    if tile >= n:
        return n
    return tile


def label_smoothing_loss(x: jax.Array, target: jax.Array,
                         smoothing: float = 0.05,
                         tile_n: int | None = None) -> jax.Array:
    """Pallas TPU implementation of LabelSmoothing.forward (training mode)."""
    assert x.shape == target.shape and x.ndim == 2
    n, c = x.shape
    if tile_n is None:
        tile_n = _choose_tile_n(n, c, jnp.dtype(x.dtype).itemsize)
    num_blocks = pl.cdiv(n, tile_n)

    kernel = functools.partial(
        _label_smoothing_kernel,
        smoothing=float(smoothing), n_rows=n, tile_n=tile_n)

    partials = pl.pallas_call(
        kernel,
        out_shape=jax.ShapeDtypeStruct((num_blocks, 8, 128), jnp.float32),
        grid_spec=pltpu.PrefetchScalarGridSpec(
            num_scalar_prefetch=0,
            grid=(num_blocks,),
            in_specs=[
                pl.BlockSpec((tile_n, c), lambda i: (i, 0)),
                pl.BlockSpec((tile_n, c), lambda i: (i, 0)),
            ],
            out_specs=pl.BlockSpec((1, 8, 128), lambda i: (i, 0, 0)),
        ),
        compiler_params=pltpu.CompilerParams(
            dimension_semantics=("parallel",),
            vmem_limit_bytes=64 * 1024 * 1024,
        ),
    )(x, target)

    # Tiny final reduction + normalization by the true row count in plain JAX.
    return jnp.sum(partials[:, 0, 0]) / n


def _reference(x, target, smoothing=0.05):
    # Pure-JAX reference mirroring the PyTorch code (for sanity checking).
    log_probs = jax.nn.log_softmax(x.astype(jnp.float32), axis=-1)
    nll = -jnp.sum(log_probs * target.astype(jnp.float32), axis=-1)
    smooth = -jnp.mean(log_probs, axis=-1)
    return jnp.mean((1.0 - smoothing) * nll + smoothing * smooth)


if __name__ == "__main__":
    key = jax.random.PRNGKey(0)
    k_x, k_c = jax.random.split(key)

    N, C = 64, 128  # small synthetic batch / class count (multi-block grid)
    x = jax.random.normal(k_x, (N, C), dtype=jnp.float32)

    # Deterministic one-hot (probability) targets; forward multiplies `target`
    # elementwise with log_probs (soft/one-hot labels).
    classes = jax.random.randint(k_c, (N,), 0, C)
    target = jax.nn.one_hot(classes, C, dtype=jnp.float32)

    # f32 path: 4 row-blocks of 16 rows each.
    loss = label_smoothing_loss(x, target, smoothing=0.05, tile_n=16)
    loss = jax.block_until_ready(loss)
    ref = _reference(x, target, smoothing=0.05)
    assert jnp.allclose(loss, ref, atol=1e-5, rtol=1e-5), (loss, ref)

    # bf16-in-HBM path (kernel upcasts internally; halves HBM traffic).
    x_bf16 = x.astype(jnp.bfloat16)
    t_bf16 = target.astype(jnp.bfloat16)
    loss_bf16 = label_smoothing_loss(x_bf16, t_bf16, smoothing=0.05, tile_n=16)
    loss_bf16 = jax.block_until_ready(loss_bf16)
    ref_bf16 = _reference(x_bf16.astype(jnp.float32), t_bf16.astype(jnp.float32),
                          smoothing=0.05)
    assert jnp.allclose(loss_bf16, ref_bf16, atol=1e-4, rtol=1e-4), (loss_bf16, ref_bf16)

    print("KERNEL_OK")
</pallas_src>

<mosaic_0001>
module attributes {stable_mosaic.version = 11 : i64} {
  func.func @_label_smoothing_kernel(%arg0: i32, %arg1: memref<16x128xf32, #tpu.memory_space<vmem>>, %arg2: memref<16x128xf32, #tpu.memory_space<vmem>>, %arg3: memref<1x8x128xf32, #tpu.memory_space<vmem>>) attributes {dimension_semantics = [#tpu.dimension_semantics<parallel>], iteration_bounds = array<i64: 4>, scalar_prefetch = 0 : i64, scratch_operands = 0 : i64, tpu.core_type = #tpu.core_type<tc>, window_params = [{transform_indices = @transform_0, window_bounds = array<i64: 16, 128>}, {transform_indices = @transform_1, window_bounds = array<i64: 16, 128>}, {transform_indices = @transform_2, window_bounds = array<i64: 1, 8, 128>}]} {
    %c0 = arith.constant 0 : index
    %c0_0 = arith.constant 0 : index
    %0 = vector.load %arg1[%c0, %c0_0] : memref<16x128xf32, #tpu.memory_space<vmem>>, vector<16x128xf32>
    %c0_1 = arith.constant 0 : index
    %c0_2 = arith.constant 0 : index
    %1 = vector.load %arg2[%c0_1, %c0_2] : memref<16x128xf32, #tpu.memory_space<vmem>>, vector<16x128xf32>
    %cst = arith.constant dense<0xFF800000> : vector<16xf32>
    %2 = vector.multi_reduction <maximumf>, %0, %cst [1] : vector<16x128xf32> to vector<16xf32>
    %3 = vector.shape_cast %2 : vector<16xf32> to vector<16x1xf32>
    %4 = vector.broadcast %3 : vector<16x1xf32> to vector<16x128xf32>
    %5 = arith.subf %0, %4 : vector<16x128xf32>
    %6 = math.exp %5 : vector<16x128xf32>
    %cst_3 = arith.constant dense<0.000000e+00> : vector<16xf32>
    %7 = vector.multi_reduction <add>, %6, %cst_3 [1] : vector<16x128xf32> to vector<16xf32>
    %8 = vector.shape_cast %7 : vector<16xf32> to vector<16x1xf32>
    %9 = math.log %8 : vector<16x1xf32>
    %cst_4 = arith.constant dense<0.000000e+00> : vector<16xf32>
    %10 = vector.multi_reduction <add>, %1, %cst_4 [1] : vector<16x128xf32> to vector<16xf32>
    %11 = vector.shape_cast %10 : vector<16xf32> to vector<16x1xf32>
    %12 = arith.mulf %5, %1 : vector<16x128xf32>
    %cst_5 = arith.constant dense<0.000000e+00> : vector<16xf32>
    %13 = vector.multi_reduction <add>, %12, %cst_5 [1] : vector<16x128xf32> to vector<16xf32>
    %14 = vector.shape_cast %13 : vector<16xf32> to vector<16x1xf32>
    %cst_6 = arith.constant dense<0.000000e+00> : vector<16xf32>
    %15 = vector.multi_reduction <add>, %5, %cst_6 [1] : vector<16x128xf32> to vector<16xf32>
    %16 = vector.shape_cast %15 : vector<16xf32> to vector<16x1xf32>
    %17 = arith.mulf %9, %11 : vector<16x1xf32>
    %18 = arith.subf %17, %14 : vector<16x1xf32>
    %cst_7 = arith.constant 7.812500e-03 : f32
    %19 = vector.broadcast %cst_7 : f32 to vector<16x1xf32>
    %20 = arith.mulf %16, %19 : vector<16x1xf32>
    %21 = arith.subf %9, %20 : vector<16x1xf32>
    %cst_8 = arith.constant 0.949999988 : f32
    %22 = vector.broadcast %cst_8 : f32 to vector<16x1xf32>
    %23 = arith.mulf %22, %18 : vector<16x1xf32>
    %cst_9 = arith.constant 5.000000e-02 : f32
    %24 = vector.broadcast %cst_9 : f32 to vector<16x1xf32>
    %25 = arith.mulf %24, %21 : vector<16x1xf32>
    %26 = arith.addf %23, %25 : vector<16x1xf32>
    %c16_i32 = arith.constant 16 : i32
    %27 = arith.muli %arg0, %c16_i32 : i32
    %28 = tpu.iota {dimensions = array<i32: 0>} : vector<16x1xi32>
    %29 = vector.broadcast %27 : i32 to vector<16x1xi32>
    %30 = arith.addi %29, %28 : vector<16x1xi32>
    %c64_i32 = arith.constant 64 : i32
    %31 = vector.broadcast %c64_i32 : i32 to vector<16x1xi32>
    %32 = arith.cmpi slt, %30, %31 : vector<16x1xi32>
    %cst_10 = arith.constant 0.000000e+00 : f32
    %33 = vector.broadcast %cst_10 : f32 to vector<16x1xf32>
    %34 = arith.select %32, %26, %33 : vector<16x1xi1>, vector<16x1xf32>
    %35 = vector.shape_cast %34 : vector<16x1xf32> to vector<1x16x1xf32>
    %cst_11 = arith.constant dense<0.000000e+00> : vector<1xf32>
    %36 = vector.multi_reduction <add>, %35, %cst_11 [1, 2] : vector<1x16x1xf32> to vector<1xf32>
    %37 = vector.shape_cast %36 : vector<1xf32> to vector<1x1x1xf32>
    %38 = vector.extract %37[0, 0, 0] : f32 from vector<1x1x1xf32>
    %39 = vector.broadcast %38 : f32 to vector<1x8x128xf32>
    %c0_12 = arith.constant 0 : index
    %c0_13 = arith.constant 0 : index
    %c0_14 = arith.constant 0 : index
    %40 = vector.load %arg3[%c0_12, %c0_13, %c0_14] : memref<1x8x128xf32, #tpu.memory_space<vmem>>, vector<1x8x128xf32>
    tpu.vector_store %arg3[%c0_12, %c0_13, %c0_14], %39 {strides = array<i32>} : memref<1x8x128xf32, #tpu.memory_space<vmem>>, vector<1x8x128xf32>,
    return
  }
  func.func @transform_0(%arg0: i32) -> (i32, i32) {
    %c0_i32 = arith.constant 0 : i32
    %c0_i32_0 = arith.constant 0 : i32
    return %arg0, %c0_i32 : i32, i32
  }
  func.func @transform_1(%arg0: i32) -> (i32, i32) {
    %c0_i32 = arith.constant 0 : i32
    %c0_i32_0 = arith.constant 0 : i32
    return %arg0, %c0_i32 : i32, i32
  }
  func.func @transform_2(%arg0: i32) -> (i32, i32, i32) {
    %c0_i32 = arith.constant 0 : i32
    %c0_i32_0 = arith.constant 0 : i32
    %c0_i32_1 = arith.constant 0 : i32
    return %arg0, %c0_i32, %c0_i32_0 : i32, i32, i32
  }
}

</mosaic_0001>

<llo_original>
// kernel: tpu_custom_call.1
$region0: #{tpu_custom_call.1}
  #allocation0 [shape = 'u32[]', space=smem, size = 0x4, offset = 0x4, fixed_abs, tag = 'smem constant byte address 0x4 - core index']
  #allocation1 [shape = 'u32[72,128]{1,0:T(1,128)}', space=vmem, size = 0x9000, scoped, tag = 'internal scratch']
  %s0 = inlined_call_operand.hbm [shape: f32[64,128], index: 0, kind: input, shape index: {}]
  %s1 = inlined_call_operand.hbm [shape: f32[64,128], index: 1, kind: input, shape index: {}]
  %s2 = inlined_call_operand.hbm [shape: f32[4,8,128], index: 2, kind: output, shape index: {}]
  %s3 = sld [smem:[#allocation0]]
  $region49: #{tpu_custom_call.1} parent=0
    _
  %s5 = ssub.s32 1, %s3
  %s6 = scalar_select 0, %s5, %s3
  $region1: #{tpu_custom_call.1} parent=0
    #allocation2 [shape = 'u8[16384]{0}', space=vmem, size = 0x4000, scoped, tag = 'input window, operand 0']
    #allocation3 [shape = 's32[2]{0}', space=sflag, size = 0x8, scoped, tag = 'scoped memory for tpu_custom_call.1']
    #allocation4 [shape = 's32[2]{0}', space=sflag, size = 0x8, scoped, tag = 'scoped memory for tpu_custom_call.1']
    #allocation5 [shape = 'u8[16384]{0}', space=vmem, size = 0x4000, scoped, tag = 'input window, operand 1']
    #allocation6 [shape = 's32[2]{0}', space=sflag, size = 0x8, scoped, tag = 'scoped memory for tpu_custom_call.1']
    #allocation7 [shape = 'u8[8192]{0}', space=vmem, size = 0x2000, scoped, tag = 'output window, operand 0']
    %7 = vsyncpa [#allocation3], 0
    %s8 = scalar_lea.sflag [#allocation3], 1
    %9 = vsyncpa %s8, 0
    %10 = vsyncpa [#allocation6], 0
    %s11 = scalar_lea.sflag [#allocation6], 1
    %12 = vsyncpa %s11, 0
    %13 = vsyncpa [#allocation4], 0
    %s14 = scalar_lea.sflag [#allocation4], 1
    %15 = vsyncpa %s14, 0
    loop: start=0, step=1, limit=6
    $region2: #{tpu_custom_call.1} parent=1 // loop_pre_header
      _
    $region3: #{tpu_custom_call.1} parent=1 // loop_header
      %s17 = sphi 0, %s21
      %p18 = scmp.ge.s32.totalorder %s17, 6
      %s27 = sphi 0, %s29
      %s30 = sphi 0, %s27
      %s31 = sphi 0, %s30
      %s47 = sphi 0, %s31
      %s53 = sphi 0, %s55
      %s56 = sphi 0, %s53
      %s57 = sphi 0, %s56
      %s73 = sphi 0, %s57
      %s79 = sphi 0, %s81
      %s82 = sphi 0, %s79
      %s83 = sphi 0, %s82
      %s99 = sphi 0, %s83
    $region4: #{tpu_custom_call.1} parent=1 // loop_header_branch
      %20 = sbr.rel (%p18) target = $region8
    $region5: #{tpu_custom_call.1} parent=1 // loop_body
      %s22 = ssub.s32 %s17, 1
      %s23 = ssub.s32 %s17, 2
      %s24 = sadd.s32 %s17, 1
      %s25 = ssub.s32 %s17, %s24
      %p26 = scmp.eq.s32.totalorder %s25, 0
      %s28 = sadd.s32 %s27, 1
      %s29 = scalar_select %p26, %s27, %s28
      %p32 = pneg %p26
      %p33 = scmp.eq.s32.totalorder %s17, 3
      %p34 = por %p32, %p33
      %p35 = scmp.ne.s32.totalorder %s27, %s30
      %p36 = scmp.eq.s32.totalorder %s17, 0
      %p37 = por %p35, %p36
      %p38 = scmp.ne.s32.totalorder %s27, %s30
      %p39 = scmp.eq.s32.totalorder %s22, 3
      %p40 = por %p38, %p39
      %p41 = scmp.ne.s32.totalorder %s30, %s31
      %p42 = scmp.eq.s32.totalorder %s22, 0
      %p43 = por %p41, %p42
      %p44 = scmp.ne.s32.totalorder %s30, %s31
      %p45 = scmp.eq.s32.totalorder %s23, 3
      %p46 = por %p44, %p45
      %p48 = scmp.ne.s32.totalorder %s31, %s47
      %p49 = scmp.eq.s32.totalorder %s23, 0
      %p50 = por %p48, %p49
      %s51 = ssub.s32 %s17, %s24
      %p52 = scmp.eq.s32.totalorder %s51, 0
      %s54 = sadd.s32 %s53, 1
      %s55 = scalar_select %p52, %s53, %s54
      %p58 = pneg %p52
      %p59 = scmp.eq.s32.totalorder %s17, 3
      %p60 = por %p58, %p59
      %p61 = scmp.ne.s32.totalorder %s53, %s56
      %p62 = scmp.eq.s32.totalorder %s17, 0
      %p63 = por %p61, %p62
      %p64 = scmp.ne.s32.totalorder %s53, %s56
      %p65 = scmp.eq.s32.totalorder %s22, 3
      %p66 = por %p64, %p65
      %p67 = scmp.ne.s32.totalorder %s56, %s57
      %p68 = scmp.eq.s32.totalorder %s22, 0
      %p69 = por %p67, %p68
      %p70 = scmp.ne.s32.totalorder %s56, %s57
      %p71 = scmp.eq.s32.totalorder %s23, 3
      %p72 = por %p70, %p71
      %p74 = scmp.ne.s32.totalorder %s57, %s73
      %p75 = scmp.eq.s32.totalorder %s23, 0
      %p76 = por %p74, %p75
      %s77 = ssub.s32 %s17, %s24
      %p78 = scmp.eq.s32.totalorder %s77, 0
      %s80 = sadd.s32 %s79, 1
      %s81 = scalar_select %p78, %s79, %s80
      %p84 = pneg %p78
      %p85 = scmp.eq.s32.totalorder %s17, 3
      %p86 = por %p84, %p85
      %p87 = scmp.ne.s32.totalorder %s79, %s82
      %p88 = scmp.eq.s32.totalorder %s17, 0
      %p89 = por %p87, %p88
      %p90 = scmp.ne.s32.totalorder %s79, %s82
      %p91 = scmp.eq.s32.totalorder %s22, 3
      %p92 = por %p90, %p91
      %p93 = scmp.ne.s32.totalorder %s82, %s83
      %p94 = scmp.eq.s32.totalorder %s22, 0
      %p95 = por %p93, %p94
      %p96 = scmp.ne.s32.totalorder %s82, %s83
      %p97 = scmp.eq.s32.totalorder %s23, 3
      %p98 = por %p96, %p97
      %p100 = scmp.ne.s32.totalorder %s83, %s99
      %p101 = scmp.eq.s32.totalorder %s23, 0
      %p102 = por %p100, %p101
      %p103 = scmp.le.s32.totalorder 1, %s17
      %p104 = scmp.lt.s32.totalorder %s17, 5
      %p105 = pnand %p103, %p104
      %p106 = pneg %p105
      // Predicated region
      $region9: #{tpu_custom_call.1} parent=5 // pred_check
        _
      $region10: #{tpu_custom_call.1} parent=5 // pred_check_branch
        %108 = sbr.rel (%p105) target = $region12
      $region11: #{tpu_custom_call.1} parent=5 // pred_region
        %s109 = ssub.s32 %s17, 1
      $region12: #{tpu_custom_call.1} parent=5 // pred_fallthru
        _
      %p110 = scmp.lt.s32.totalorder %s17, 4
      // Predicated region
      $region13: #{tpu_custom_call.1} parent=5 // pred_check
        %p111 = pneg %p110
      $region14: #{tpu_custom_call.1} parent=5 // pred_check_branch
        %113 = sbr.rel (%p111) target = $region16
      $region15: #{tpu_custom_call.1} parent=5 // pred_region
        // Predicated region
        $region17: #{tpu_custom_call.1} parent=15 // pred_check
          %p114 = pneg %p37
        $region18: #{tpu_custom_call.1} parent=15 // pred_check_branch
          %116 = sbr.rel (%p114) target = $region20
        $region19: #{tpu_custom_call.1} parent=15 // pred_region
          %s117 = sand.u32 %s27, 1
          %s118 = scalar_lea.sflag [#allocation3], %s117
          %s119 = sand.u32 %s27, 1
          %s120 = smul.addr %s119, 16
          %s121 = scalar_lea.vmem [#allocation2], %s120
          %s122 = smul.u32 2, %s17
          %124 = vsyncadd %s118, 0
          %s125 = smul.addr %s122, 8
          %s126 = scalar_lea.hbm %s0, %s125
          %s127 = sshll.u32 %s126, 4
          %s128 = int_to_ptr.hbm [resolvable:$true] %s127
          %s129 = sshll.u32 %s121, 4
          %s130 = int_to_ptr.vmem [resolvable:$true] %s129
          %135 = dma.hbm_to_vmem [thread:$0]  %s128, 256, %s130, %s118, 128, 128, 8
        $region20: #{tpu_custom_call.1} parent=15 // pred_fallthru
          _
        // Predicated region
        $region21: #{tpu_custom_call.1} parent=15 // pred_check
          %p136 = pneg %p63
        $region22: #{tpu_custom_call.1} parent=15 // pred_check_branch
          %138 = sbr.rel (%p136) target = $region24
        $region23: #{tpu_custom_call.1} parent=15 // pred_region
          %s139 = sand.u32 %s53, 1
          %s140 = scalar_lea.sflag [#allocation6], %s139
          %s141 = sand.u32 %s53, 1
          %s142 = smul.addr %s141, 16
          %s143 = scalar_lea.vmem [#allocation5], %s142
          %s144 = smul.u32 2, %s17
          %146 = vsyncadd %s140, 0
          %s147 = smul.addr %s144, 8
          %s148 = scalar_lea.hbm %s1, %s147
          %s149 = sshll.u32 %s148, 4
          %s150 = int_to_ptr.hbm [resolvable:$true] %s149
          %s151 = sshll.u32 %s143, 4
          %s152 = int_to_ptr.vmem [resolvable:$true] %s151
          %157 = dma.hbm_to_vmem [thread:$0]  %s150, 256, %s152, %s140, 128, 128, 8
        $region24: #{tpu_custom_call.1} parent=15 // pred_fallthru
          _
      $region16: #{tpu_custom_call.1} parent=5 // pred_fallthru
        _
      %p158 = scmp.le.s32.totalorder 1, %s17
      %p159 = scmp.lt.s32.totalorder %s17, 5
      %p160 = pnand %p158, %p159
      %p161 = pneg %p160
      // Predicated region
      $region25: #{tpu_custom_call.1} parent=5 // pred_check
        _
      $region26: #{tpu_custom_call.1} parent=5 // pred_check_branch
        %163 = sbr.rel (%p160) target = $region28
      $region27: #{tpu_custom_call.1} parent=5 // pred_region
        %s164 = ssub.s32 %s17, 1
        %s165 = sand.u32 %s30, 1
        %s166 = scalar_lea.sflag [#allocation3], %s165
        %s167 = sand.u32 %s30, 1
        %s168 = smul.addr %s167, 16
        %s169 = scalar_lea.vmem [#allocation2], %s168
        // Predicated region
        $region29: #{tpu_custom_call.1} parent=27 // pred_check
          %p170 = pneg %p43
        $region30: #{tpu_custom_call.1} parent=27 // pred_check_branch
          %172 = sbr.rel (%p170) target = $region32
        $region31: #{tpu_custom_call.1} parent=27 // pred_region
          %174 = dma.done %s166, 256
        $region32: #{tpu_custom_call.1} parent=27 // pred_fallthru
          _
        %s175 = sand.u32 %s56, 1
        %s176 = scalar_lea.sflag [#allocation6], %s175
        %s177 = sand.u32 %s56, 1
        %s178 = smul.addr %s177, 16
        %s179 = scalar_lea.vmem [#allocation5], %s178
        // Predicated region
        $region33: #{tpu_custom_call.1} parent=27 // pred_check
          %p180 = pneg %p69
        $region34: #{tpu_custom_call.1} parent=27 // pred_check_branch
          %182 = sbr.rel (%p180) target = $region36
        $region35: #{tpu_custom_call.1} parent=27 // pred_region
          %184 = dma.done %s176, 256
        $region36: #{tpu_custom_call.1} parent=27 // pred_fallthru
          _
        %s185 = sand.u32 %s30, 1
        %s186 = scalar_lea.sflag [#allocation3], %s185
        %s187 = sand.u32 %s30, 1
        %s188 = smul.addr %s187, 16
        %s189 = scalar_lea.vmem [#allocation2], %s188
        %p190 = pneg %p43
        %p191 = pneg %p40
        %s192 = sand.u32 %s56, 1
        %s193 = scalar_lea.sflag [#allocation6], %s192
        %s194 = sand.u32 %s56, 1
        %s195 = smul.addr %s194, 16
        %s196 = scalar_lea.vmem [#allocation5], %s195
        %p197 = pneg %p69
        %p198 = pneg %p66
        %p199 = pneg %p95
        %p200 = pneg %p92
        %s201 = sand.u32 %s82, 1
        %s202 = scalar_lea.sflag [#allocation4], %s201
        %s203 = sand.u32 %s82, 1
        %s204 = smul.addr %s203, 8
        %s205 = scalar_lea.vmem [#allocation7], %s204
        %s206 = smul.u32 2, %s22
        %s207 = smul.u32 2, %s22
        %v208 = vld [vmem:[%s169] sm:$0xff]
        %v209 = vld [vmem:[%s169 + $0x8] sm:$0xff]
        %v210 = vld [vmem:[%s179] sm:$0xff]
        %v211 = vld [vmem:[%s179 + $0x8] sm:$0xff]
        %212 = vmax.xlane.f32.xlu0 %v208
        %v213 = vpop.xlane.xlu0 %212
        %214 = vmax.xlane.f32.xlu0 %v209
        %v215 = vpop.xlane.xlu0 %214
        %v216 = vsub.f32 %v208, %v213
        %v217 = vsub.f32 %v209, %v215
        %v218 = vmul.f32 %v216, 1.442695
        %v219 = vpow.pop %v218
        %v220 = vmul.f32 %v217, 1.442695
        %v221 = vpow.pop %v220
        %222 = vadd.xlane.f32.xlu0 %v219
        %v223 = vpop.xlane.xlu0 %222
        %224 = vadd.xlane.f32.xlu0 %v221
        %v225 = vpop.xlane.xlu0 %224
        %v226 = vlog2.pop %v223
        %v227 = vmul.f32 %v226, 0.6931472
        %v228 = vlog2.pop %v225
        %v229 = vmul.f32 %v228, 0.6931472
        %230 = vadd.xlane.f32.xlu0 %v210
        %v231 = vpop.xlane.xlu0 %230
        %232 = vadd.xlane.f32.xlu0 %v211
        %v233 = vpop.xlane.xlu0 %232
        %v234 = vmul.f32 %v216, %v210
        %v235 = vmul.f32 %v217, %v211
        %236 = vadd.xlane.f32.xlu0 %v234
        %v237 = vpop.xlane.xlu0 %236
        %238 = vadd.xlane.f32.xlu0 %v235
        %v239 = vpop.xlane.xlu0 %238
        %240 = vadd.xlane.f32.xlu0 %v216
        %v241 = vpop.xlane.xlu0 %240
        %242 = vadd.xlane.f32.xlu0 %v217
        %v243 = vpop.xlane.xlu0 %242
        %v244 = vmul.f32 %v227, %v231
        %v245 = vmul.f32 %v229, %v233
        %v246 = vsub.f32 %v244, %v237
        %v247 = vsub.f32 %v245, %v239
        %v248 = vmul.f32 %v241, 0.0078125
        %v249 = vmul.f32 %v243, 0.0078125
        %v250 = vsub.f32 %v227, %v248
        %v251 = vsub.f32 %v229, %v249
        %v252 = vmul.f32 %v246, 0.95
        %v253 = vmul.f32 %v247, 0.95
        %v254 = vmul.f32 %v250, 0.05
        %v255 = vmul.f32 %v251, 0.05
        %v256 = vadd.f32 %v252, %v254
        %v257 = vadd.f32 %v253, %v255
        %s258 = smul.u32 %s22, 16
        %v259 = vlaneseq
        %v260 = vshrl.u32 %v259, 7
        %v261 = vadd.s32 %v260, 8
        %v262 = vstv %s258
        %v263 = vadd.s32 %v262, %v260
        %v264 = vadd.s32 %v262, %v261
        %vm265 = vcmp.lt.s32.totalorder %v263, 64
        %vm266 = vcmp.lt.s32.totalorder %v264, 64
        %v267 = vsel %vm265, %v256, 0.0
        %v268 = vsel %vm266, %v257, 0.0
        %vm269 = vcmask 7168
        %v270 = vsel %vm269, %v267, 0.0
        %v271 = vsel %vm269, %v268, 0.0
        %v272 = vadd.f32 %v270, %v271
        %273 = vadd.xlane.f32.xlu0 %v272
        %v274 = vpop.xlane.xlu0 %273
        %v275 = vrot.slane %v274, 4
        %v276 = vadd.f32 %v274, %v275
        %v277 = vrot.slane %v276, 2
        %v278 = vadd.f32 %v276, %v277
        %v279 = vrot.slane %v278, 1
        %v280 = vadd.f32 %v278, %v279
        %s281 = vtos %v280
        %v282 = vstv %s281
        %283 = vst [vmem:[%s205] sm:$0xff] %v282
        %s284 = sand.u32 %s82, 1
        %s285 = scalar_lea.sflag [#allocation4], %s284
        %s286 = sand.u32 %s82, 1
        %s287 = smul.addr %s286, 8
        %s288 = scalar_lea.vmem [#allocation7], %s287
        // Predicated region
        $region37: #{tpu_custom_call.1} parent=27 // pred_check
          %p289 = pneg %p92
        $region38: #{tpu_custom_call.1} parent=27 // pred_check_branch
          %291 = sbr.rel (%p289) target = $region40
        $region39: #{tpu_custom_call.1} parent=27 // pred_region
          %293 = vsyncadd %s285, 0
          %s294 = smul.addr %s22, 8
          %s295 = scalar_lea.hbm %s2, %s294
          %s297 = sshll.u32 %s288, 4
          %s298 = int_to_ptr.vmem [resolvable:$true] %s297
          %s299 = sshll.u32 %s295, 4
          %s300 = int_to_ptr.hbm [resolvable:$true] %s299
          %302 = dma.vmem_to_hbm [thread:$0]  %s298, 128, %s300, %s285
        $region40: #{tpu_custom_call.1} parent=27 // pred_fallthru
          _
      $region28: #{tpu_custom_call.1} parent=5 // pred_fallthru
        _
      %p303 = scmp.le.s32.totalorder 2, %s17
      // Predicated region
      $region41: #{tpu_custom_call.1} parent=5 // pred_check
        %p304 = pneg %p303
      $region42: #{tpu_custom_call.1} parent=5 // pred_check_branch
        %306 = sbr.rel (%p304) target = $region44
      $region43: #{tpu_custom_call.1} parent=5 // pred_region
        %s307 = ssub.s32 %s17, 2
        // Predicated region
        $region45: #{tpu_custom_call.1} parent=43 // pred_check
          %p308 = pneg %p98
        $region46: #{tpu_custom_call.1} parent=43 // pred_check_branch
          %310 = sbr.rel (%p308) target = $region48
        $region47: #{tpu_custom_call.1} parent=43 // pred_region
          %s311 = sand.u32 %s83, 1
          %s312 = scalar_lea.sflag [#allocation4], %s311
          %s313 = sand.u32 %s83, 1
          %s314 = smul.addr %s313, 8
          %s315 = scalar_lea.vmem [#allocation7], %s314
          %317 = dma.done %s312, 128
        $region48: #{tpu_custom_call.1} parent=43 // pred_fallthru
          _
      $region44: #{tpu_custom_call.1} parent=5 // pred_fallthru
        _
    $region6: #{tpu_custom_call.1} parent=1 // loop_footer
      %s21 = sadd.s32 1, %s17
    $region7: #{tpu_custom_call.1} parent=1 // loop_footer_branch
      %16 = sbr.rel target = $region3
    $region8: #{tpu_custom_call.1} parent=1 // loop_exit
      _
    %318 = vsyncpa [#allocation3], 1
    %s319 = scalar_lea.sflag [#allocation3], 1
    %320 = vsyncpa %s319, 1
    %321 = vsyncpa [#allocation6], 1
    %s322 = scalar_lea.sflag [#allocation6], 1
    %323 = vsyncpa %s322, 1
    %324 = vsyncpa [#allocation4], 1
    %s325 = scalar_lea.sflag [#allocation4], 1
    %326 = vsyncpa %s325, 1

</llo_original>
